<compile_context>
chip_gen: v6e
topology: v6e:2x2x1
jax: 0.10.0
libtpu: 0.0.40
codegen_flags: <defaults>
</compile_context>

<pallas_src>
from math import sqrt
import functools

import jax
import jax.numpy as jnp
from jax.experimental import pallas as pl
from jax.experimental.pallas import tpu as pltpu


def radial_map_kernel(alpha_ref, bp_ref, z_ref, z0_ref, fz_ref, logdet_ref, *, dim):
    """One batch-tile of the radial flow forward pass.

    alpha_ref, bp_ref : SMEM scalars, shape (1,)
    z_ref             : VMEM (TB, D) io dtype
    z0_ref            : VMEM (1, D)  f32
    fz_ref            : VMEM (TB, D) io dtype
    logdet_ref        : VMEM (TB, 1) f32
    """
    alpha = alpha_ref[0]
    beta_prime = bp_ref[0]

    z = z_ref[...].astype(jnp.float32)           # (TB, D)
    z0 = z0_ref[...]                             # (1, D) f32, broadcast over rows

    diff = z - z0                                # (TB, D)
    # Per-row L2 norm: lane reduction goes to the XLU (free slot vs. VPU work).
    r = jnp.sqrt(jnp.sum(diff * diff, axis=1, keepdims=True))   # (TB, 1)
    h = 1.0 / (alpha + r)                                       # (TB, 1)
    s = beta_prime * h                                          # (TB, 1), hoisted

    fz_ref[...] = (z + s * diff).astype(fz_ref.dtype)

    bh = 1.0 + s                                                # (TB, 1)
    # beta' * dh * r = -beta' * h^2 * r = -s * h * r
    second = bh - s * h * r                                     # (TB, 1)

    # Log-space log-determinant (logs go to the otherwise idle EUP slot) with
    # explicit sign handling so the result matches the reference integer-pow
    # formulation:  det = bh**(dim-1) * second;  logdet = log(det)
    #   -> NaN iff det < 0, -inf iff det == 0, finite otherwise.
    log_abs = jnp.log(jnp.abs(second))
    if dim > 1:
        log_abs = log_abs + (dim - 1) * jnp.log(jnp.abs(bh))
    if (dim - 1) % 2 == 0:
        det_is_neg = second < 0.0                       # bh**(even) >= 0
    else:
        det_is_neg = jnp.logical_xor(bh < 0.0, second < 0.0)
    logdet_ref[...] = jnp.where(det_is_neg, jnp.float32(jnp.nan), log_abs)


def radial_map_forward(z, z0, alpha, beta):
    """Pallas wrapper reproducing RadialMap.forward(z, h)."""
    B, D = z.shape
    io_dtype = z.dtype
    itemsize = jnp.dtype(io_dtype).itemsize

    # glue: scalar parameter preprocessing (softplus on one scalar)
    beta_prime = (-alpha.astype(jnp.float32)
                  + jax.nn.softplus(beta.astype(jnp.float32)))          # (1,)

    # Dtype-aware sublane packing: f32 -> 8 rows/vreg, bf16 -> 16, int8/fp8 -> 32.
    pack = 8 * max(1, 4 // itemsize)

    # Batch-tile sizing by bytes, not rows:
    #  * target ~4 MiB of z per block (long DMA bursts, few grid steps),
    #  * capped so 2x double-buffered (z + f_z) io blocks plus ~3 f32
    #    temporaries (z upcast, diff, f_z pre-cast) stay under ~40 MiB
    #    (comfortably inside v7x's 64 MiB physical VMEM).
    row_bytes_io = D * itemsize
    row_bytes_resident = 4 * row_bytes_io + 3 * D * 4
    vmem_budget = 40 * 1024 * 1024
    tb_cap = max(pack, (vmem_budget // row_bytes_resident) // pack * pack)

    target_block_bytes = 4 * 1024 * 1024
    tb_target = max(pack, (target_block_bytes // max(row_bytes_io, 1)) // pack * pack)

    if B <= pack:
        TB = B                                   # block dim == full array dim
    else:
        TB = min(tb_target, tb_cap, B)
        TB = max(pack, (TB // pack) * pack)
        # v7x has 2 TensorCores: make sure the 'parallel' axis has >= 2 grid
        # steps when the batch allows it (no cost on single-TC v5e/v6e).
        if pl.cdiv(B, TB) < 2:
            half = -(-B // 2)                    # ceil(B / 2)
            half = -(-half // pack) * pack       # round up to sublane pack
            if half < B:
                TB = half

    # Ragged batch tail: partial last block, masked by Pallas (no wrapper pad).
    num_tiles = pl.cdiv(B, TB)

    # Explicit VMEM limit: double-buffered io blocks + f32 temporaries + slack,
    # clamped to a range valid on all generations (v5e scoped default is only
    # 16 MiB; v7x physical VMEM is 64 MiB).
    block_io = 2 * (TB * D * itemsize) + TB * 4 + D * 4   # z + f_z + logdet + z0
    f32_temps = 4 * TB * D * 4                            # upcast/diff/pre-cast headroom
    vmem_limit = int(min(max(2 * block_io + f32_temps + (2 << 20), 16 << 20), 60 << 20))

    kernel = functools.partial(radial_map_kernel, dim=D)

    fz, logdet = pl.pallas_call(
        kernel,
        out_shape=(
            jax.ShapeDtypeStruct((B, D), io_dtype),
            jax.ShapeDtypeStruct((B, 1), jnp.float32),
        ),
        grid=(num_tiles,),
        in_specs=[
            pl.BlockSpec(memory_space=pltpu.MemorySpace.SMEM),   # alpha
            pl.BlockSpec(memory_space=pltpu.MemorySpace.SMEM),   # beta_prime
            pl.BlockSpec((TB, D), lambda i: (i, 0)),             # z
            pl.BlockSpec((1, D), lambda i: (0, 0)),              # z0
        ],
        out_specs=(
            pl.BlockSpec((TB, D), lambda i: (i, 0)),             # f_z
            pl.BlockSpec((TB, 1), lambda i: (i, 0)),             # logdet
        ),
        compiler_params=pltpu.CompilerParams(
            dimension_semantics=("parallel",),
            vmem_limit_bytes=vmem_limit,
        ),
    )(alpha.astype(jnp.float32), beta_prime.astype(jnp.float32),
      z, z0.astype(jnp.float32))

    return fz, logdet


def radial_map_reference(z, z0, alpha, beta):
    """Pure-JAX reference mirroring the PyTorch module exactly."""
    dim = z.shape[1]
    beta_prime = -alpha + jax.nn.softplus(beta)
    diff = z - z0
    r = jnp.linalg.norm(diff, axis=1, keepdims=True)
    h = 1.0 / (alpha + r)
    dh = -h ** 2
    f_z = z + beta_prime * h * diff
    det = (1 + beta_prime * h) ** (dim - 1) * (1 + beta_prime * h + beta_prime * dh * r)
    return f_z, jnp.log(det)


if __name__ == "__main__":
    # Module: RadialMap(dim).  Inputs: z (batch, dim); h is unused.
    batch, dim = 8, 16

    key = jax.random.PRNGKey(0)
    kz, k0, ka, kb = jax.random.split(key, 4)

    # Deterministic parameter init following reset_parameters():
    # uniform(-a, a) with a = sqrt(6 / dim)
    a = sqrt(6.0 / dim)
    z0 = jax.random.uniform(k0, (1, dim), jnp.float32, minval=-a, maxval=a)
    alpha = jax.random.uniform(ka, (1,), jnp.float32, minval=-a, maxval=a)
    beta = jax.random.uniform(kb, (1,), jnp.float32, minval=-a, maxval=a)

    # Example latent input
    z = jax.random.normal(kz, (batch, dim), jnp.float32)

    fz, logdet = radial_map_forward(z, z0, alpha, beta)
    jax.block_until_ready((fz, logdet))

    fz_ref, logdet_ref = radial_map_reference(z, z0, alpha, beta)
    assert fz.shape == (batch, dim) and logdet.shape == (batch, 1)
    assert jnp.allclose(fz, fz_ref, atol=1e-5, rtol=1e-5)
    assert jnp.allclose(logdet, logdet_ref, atol=1e-5, rtol=1e-5)

    print("KERNEL_OK")
</pallas_src>

<mosaic_0001>
module attributes {stable_mosaic.version = 11 : i64} {
  func.func @radial_map_kernel(%arg0: i32, %arg1: memref<1xf32, #tpu.memory_space<smem>>, %arg2: memref<1xf32, #tpu.memory_space<smem>>, %arg3: memref<8x16xf32, #tpu.memory_space<vmem>>, %arg4: memref<1x16xf32, #tpu.memory_space<vmem>>, %arg5: memref<8x16xf32, #tpu.memory_space<vmem>>, %arg6: memref<8x1xf32, #tpu.memory_space<vmem>>) attributes {dimension_semantics = [#tpu.dimension_semantics<parallel>], iteration_bounds = array<i64: 1>, scalar_prefetch = 0 : i64, scratch_operands = 0 : i64, tpu.core_type = #tpu.core_type<tc>, window_params = [{transform_indices = @transform_0, window_bounds = array<i64: 1>}, {transform_indices = @transform_1, window_bounds = array<i64: 1>}, {transform_indices = @transform_2, window_bounds = array<i64: 8, 16>}, {pipeline_mode = #tpu.pipeline_mode<synchronous>, transform_indices = @transform_3, window_bounds = array<i64: 1, 16>}, {transform_indices = @transform_4, window_bounds = array<i64: 8, 16>}, {transform_indices = @transform_5, window_bounds = array<i64: 8, 1>}]} {
    %c0 = arith.constant 0 : index
    %0 = memref.load %arg1[%c0] : memref<1xf32, #tpu.memory_space<smem>>
    %c0_0 = arith.constant 0 : index
    %1 = memref.load %arg2[%c0_0] : memref<1xf32, #tpu.memory_space<smem>>
    %c0_1 = arith.constant 0 : index
    %c0_2 = arith.constant 0 : index
    %2 = vector.load %arg3[%c0_1, %c0_2] : memref<8x16xf32, #tpu.memory_space<vmem>>, vector<8x16xf32>
    %c0_3 = arith.constant 0 : index
    %c0_4 = arith.constant 0 : index
    %3 = vector.load %arg4[%c0_3, %c0_4] : memref<1x16xf32, #tpu.memory_space<vmem>>, vector<1x16xf32>
    %4 = vector.broadcast %3 : vector<1x16xf32> to vector<8x16xf32>
    %5 = arith.subf %2, %4 : vector<8x16xf32>
    %6 = arith.mulf %5, %5 : vector<8x16xf32>
    %cst = arith.constant dense<0.000000e+00> : vector<8xf32>
    %7 = vector.multi_reduction <add>, %6, %cst [1] : vector<8x16xf32> to vector<8xf32>
    %8 = vector.shape_cast %7 : vector<8xf32> to vector<8x1xf32>
    %9 = math.sqrt %8 : vector<8x1xf32>
    %10 = vector.broadcast %0 : f32 to vector<8x1xf32>
    %11 = arith.addf %10, %9 : vector<8x1xf32>
    %cst_5 = arith.constant 1.000000e+00 : f32
    %12 = vector.broadcast %cst_5 : f32 to vector<8x1xf32>
    %13 = arith.divf %12, %11 : vector<8x1xf32>
    %14 = vector.broadcast %1 : f32 to vector<8x1xf32>
    %15 = arith.mulf %14, %13 : vector<8x1xf32>
    %16 = vector.broadcast %15 : vector<8x1xf32> to vector<8x16xf32>
    %17 = arith.mulf %16, %5 : vector<8x16xf32>
    %18 = arith.addf %2, %17 : vector<8x16xf32>
    %c0_6 = arith.constant 0 : index
    %c0_7 = arith.constant 0 : index
    %19 = vector.load %arg5[%c0_6, %c0_7] : memref<8x16xf32, #tpu.memory_space<vmem>>, vector<8x16xf32>
    tpu.vector_store %arg5[%c0_6, %c0_7], %18 {strides = array<i32>} : memref<8x16xf32, #tpu.memory_space<vmem>>, vector<8x16xf32>,
    %cst_8 = arith.constant 1.000000e+00 : f32
    %20 = vector.broadcast %cst_8 : f32 to vector<8x1xf32>
    %21 = arith.addf %20, %15 : vector<8x1xf32>
    %22 = arith.mulf %15, %13 : vector<8x1xf32>
    %23 = arith.mulf %22, %9 : vector<8x1xf32>
    %24 = arith.subf %21, %23 : vector<8x1xf32>
    %25 = math.absf %24 : vector<8x1xf32>
    %26 = math.log %25 : vector<8x1xf32>
    %27 = math.absf %21 : vector<8x1xf32>
    %28 = math.log %27 : vector<8x1xf32>
    %cst_9 = arith.constant 1.500000e+01 : f32
    %29 = vector.broadcast %cst_9 : f32 to vector<8x1xf32>
    %30 = arith.mulf %29, %28 : vector<8x1xf32>
    %31 = arith.addf %26, %30 : vector<8x1xf32>
    %cst_10 = arith.constant 0.000000e+00 : f32
    %32 = vector.broadcast %cst_10 : f32 to vector<8x1xf32>
    %33 = arith.cmpf olt, %21, %32 : vector<8x1xf32>
    %cst_11 = arith.constant 0.000000e+00 : f32
    %34 = vector.broadcast %cst_11 : f32 to vector<8x1xf32>
    %35 = arith.cmpf olt, %24, %34 : vector<8x1xf32>
    %36 = arith.xori %33, %35 : vector<8x1xi1>
    %cst_12 = arith.constant 0x7FC00000 : f32
    %37 = vector.broadcast %cst_12 : f32 to vector<8x1xf32>
    %38 = arith.select %36, %37, %31 : vector<8x1xi1>, vector<8x1xf32>
    %c0_13 = arith.constant 0 : index
    %c0_14 = arith.constant 0 : index
    %39 = vector.load %arg6[%c0_13, %c0_14] : memref<8x1xf32, #tpu.memory_space<vmem>>, vector<8x1xf32>
    tpu.vector_store %arg6[%c0_13, %c0_14], %38 {strides = array<i32>} : memref<8x1xf32, #tpu.memory_space<vmem>>, vector<8x1xf32>,
    return
  }
  func.func @transform_0(%arg0: i32) -> i32 {
    %c0_i32 = arith.constant 0 : i32
    %c0_i32_0 = arith.constant 0 : i32
    return %c0_i32 : i32
  }
  func.func @transform_1(%arg0: i32) -> i32 {
    %c0_i32 = arith.constant 0 : i32
    %c0_i32_0 = arith.constant 0 : i32
    return %c0_i32 : i32
  }
  func.func @transform_2(%arg0: i32) -> (i32, i32) {
    %c0_i32 = arith.constant 0 : i32
    %c0_i32_0 = arith.constant 0 : i32
    return %arg0, %c0_i32 : i32, i32
  }
  func.func @transform_3(%arg0: i32) -> (i32, i32) {
    %c0_i32 = arith.constant 0 : i32
    %c0_i32_0 = arith.constant 0 : i32
    %c0_i32_1 = arith.constant 0 : i32
    return %c0_i32, %c0_i32_0 : i32, i32
  }
  func.func @transform_4(%arg0: i32) -> (i32, i32) {
    %c0_i32 = arith.constant 0 : i32
    %c0_i32_0 = arith.constant 0 : i32
    return %arg0, %c0_i32 : i32, i32
  }
  func.func @transform_5(%arg0: i32) -> (i32, i32) {
    %c0_i32 = arith.constant 0 : i32
    %c0_i32_0 = arith.constant 0 : i32
    return %arg0, %c0_i32 : i32, i32
  }
}

</mosaic_0001>

<llo_original>
// kernel: tpu_custom_call.1
$region0: #{tpu_custom_call.1}
  #allocation0 [shape = 'u32[]', space=smem, size = 0x4, offset = 0x4, fixed_abs, tag = 'smem constant byte address 0x4 - core index']
  #allocation1 [shape = 'u32[144,128]{1,0:T(1,128)}', space=vmem, size = 0x12000, scoped, tag = 'internal scratch']
  #allocation2 [shape = 'f32[1]{0:T(128)S(6)}', space=smem, size = 0x200, scoped, tag = 'scoped memory for tpu_custom_call.1']
  #allocation3 [shape = 'f32[1]{0:T(128)S(6)}', space=smem, size = 0x200, scoped, tag = 'scoped memory for tpu_custom_call.1']
  %s0 = inlined_call_operand.<no memory space> [shape: f32[1], index: 0, kind: input, shape index: {}]
  %s1 = inlined_call_operand.<no memory space> [shape: f32[1], index: 1, kind: input, shape index: {}]
  %s2 = inlined_call_operand.hbm [shape: f32[8,16], index: 2, kind: input, shape index: {}]
  %s3 = inlined_call_operand.vmem [shape: f32[1,16], index: 3, kind: input, shape index: {}]
  %s4 = inlined_call_operand.hbm [shape: f32[8,16], index: 4, kind: output, shape index: {0}]
  %s5 = inlined_call_operand.vmem [shape: f32[8,1], index: 5, kind: output, shape index: {1}]
  %6 = xla_tuple %s4, %s5
  %s7 = sld [smem:[#allocation0]]
  $region38: #{tpu_custom_call.1} parent=0
    _
  %s9 = ssub.s32 1, %s7
  %s10 = scalar_select 0, %s9, %s7
  %11 = sst [smem:[#allocation2]] %s0
  %12 = sst [smem:[#allocation3]] %s1
  $region1: #{tpu_custom_call.1} parent=0
    #allocation4 [shape = 'u8[4096]{0}', space=vmem, size = 0x1000, scoped, tag = 'input window, operand 2, single buffered']
    #allocation5 [shape = 's32[1]{0}', space=sflag, size = 0x4, scoped, tag = 'scoped memory for tpu_custom_call.1']
    #allocation6 [shape = 's32[1]{0}', space=sflag, size = 0x4, scoped, tag = 'scoped memory for tpu_custom_call.1']
    #allocation7 [shape = 'u8[4096]{0}', space=vmem, size = 0x1000, scoped, tag = 'output window, operand 0, single buffered']
    %13 = vsyncpa [#allocation5], 0
    %14 = vsyncpa [#allocation6], 0
    // Predicated region
    $region2: #{tpu_custom_call.1} parent=1 // pred_check
      _
    $region3: #{tpu_custom_call.1} parent=1 // pred_check_branch
      %16 = sbr.rel (0) target = $region5
    $region4: #{tpu_custom_call.1} parent=1 // pred_region
      _
    $region5: #{tpu_custom_call.1} parent=1 // pred_fallthru
      _
    // Predicated region
    $region6: #{tpu_custom_call.1} parent=1 // pred_check
      _
    $region7: #{tpu_custom_call.1} parent=1 // pred_check_branch
      %18 = sbr.rel (0) target = $region9
    $region8: #{tpu_custom_call.1} parent=1 // pred_region
      _
    $region9: #{tpu_custom_call.1} parent=1 // pred_fallthru
      _
    // Predicated region
    $region10: #{tpu_custom_call.1} parent=1 // pred_check
      _
    $region11: #{tpu_custom_call.1} parent=1 // pred_check_branch
      %20 = sbr.rel (0) target = $region13
    $region12: #{tpu_custom_call.1} parent=1 // pred_region
      %s22 = ssub.s32 128, 128
      %23 = vsyncadd [#allocation5], %s22
      %s25 = sshll.u32 [#allocation4], 4
      %s26 = int_to_ptr.vmem [resolvable:$true] %s25
      %28 = dma.hbm_to_vmem [thread:$0]  %s2, 128, %s26, [#allocation5]
    $region13: #{tpu_custom_call.1} parent=1 // pred_fallthru
      _
    // Predicated region
    $region14: #{tpu_custom_call.1} parent=1 // pred_check
      _
    $region15: #{tpu_custom_call.1} parent=1 // pred_check_branch
      %30 = sbr.rel (0) target = $region17
    $region16: #{tpu_custom_call.1} parent=1 // pred_region
      _
    $region17: #{tpu_custom_call.1} parent=1 // pred_fallthru
      _
    // Predicated region
    $region18: #{tpu_custom_call.1} parent=1 // pred_check
      _
    $region19: #{tpu_custom_call.1} parent=1 // pred_check_branch
      %32 = sbr.rel (0) target = $region21
    $region20: #{tpu_custom_call.1} parent=1 // pred_region
      %33 = dma.done [#allocation5], 128
    $region21: #{tpu_custom_call.1} parent=1 // pred_fallthru
      _
    %s34 = sld [smem:[#allocation2]]
    %s35 = sld [smem:[#allocation3]]
    %v36 = vld [vmem:[#allocation4] sm:$0xff]
    %v37 = vld [vmem:[%s3] sm:$0x1]
    %v39 = vlaneseq
    %v40 = vshrl.u32 %v39, 7
    %v41 = vsub.s32 0, %v40
    %v42 = vrot.slane %v37, %v41
    %v44 = vsub.f32 %v36, %v42
    %v45 = vmul.f32 %v44, %v44
    %vm46 = vcmask 130048
    %v47 = vsel %vm46, %v45, 0.0
    %48 = vadd.xlane.f32.xlu0 %v47
    %v49 = vpop.xlane.xlu0 %48
    %v50 = vrsqrt.pop %v49
    %v51 = vmul.f32 %v49, %v50
    %vm52 = vcmp.eq.f32.partialorder %v49, inf
    %v53 = vsel %vm52, %v49, %v51
    %vm54 = vcmp.eq.f32.partialorder %v49, 0.0
    %v55 = vand.u32 %v49, 2147483648
    %v56 = vsel %vm54, %v55, %v53
    %v57 = vstv %s34
    %v58 = vadd.f32 %v57, %v56
    %v59 = vrcp.pop %v58
    %v60 = vmul.f32 1.0, %v59
    %v61 = vstv %s35
    %v62 = vmul.f32 %v61, %v60
    %v63 = vmul.f32 %v62, %v44
    %v64 = vadd.f32 %v36, %v63
    %65 = vst.msk [vmem:[#allocation7] sm:$0xff] %vm46, %v64
    %v66 = vadd.f32 %v62, 1.0
    %v67 = vmul.f32 %v62, %v60
    %v68 = vmul.f32 %v67, %v56
    %v69 = vsub.f32 %v66, %v68
    %v70 = vand.u32 2147483647, %v69
    %v71 = vlog2.pop %v70
    %v72 = vmul.f32 %v71, 0.6931472
    %v73 = vand.u32 2147483647, %v66
    %v74 = vlog2.pop %v73
    %v75 = vmul.f32 %v74, 0.6931472
    %v76 = vmul.f32 %v75, 15.0
    %v77 = vadd.f32 %v72, %v76
    %vm78 = vcmp.lt.f32.partialorder %v66, 0.0
    %vm79 = vcmp.lt.f32.partialorder %v69, 0.0
    %vm80 = vmxor %vm78, %vm79
    %v81 = vsel %vm80, nan, %v77
    %vm82 = vcmask 7168
    %83 = vst.msk [vmem:[%s5] sm:$0xff] %vm82, %v81
    // Predicated region
    $region22: #{tpu_custom_call.1} parent=1 // pred_check
      _
    $region23: #{tpu_custom_call.1} parent=1 // pred_check_branch
      %85 = sbr.rel (0) target = $region25
    $region24: #{tpu_custom_call.1} parent=1 // pred_region
      %s87 = ssub.s32 128, 128
      %88 = vsyncadd [#allocation6], %s87
      %s90 = sshll.u32 [#allocation7], 4
      %s91 = int_to_ptr.vmem [resolvable:$true] %s90
      %93 = dma.vmem_to_hbm [thread:$0]  %s91, 128, %s4, [#allocation6]
    $region25: #{tpu_custom_call.1} parent=1 // pred_fallthru
      _
    // Predicated region
    $region26: #{tpu_custom_call.1} parent=1 // pred_check
      _
    $region27: #{tpu_custom_call.1} parent=1 // pred_check_branch
      %95 = sbr.rel (0) target = $region29
    $region28: #{tpu_custom_call.1} parent=1 // pred_region
      _
    $region29: #{tpu_custom_call.1} parent=1 // pred_fallthru
      _
    // Predicated region
    $region30: #{tpu_custom_call.1} parent=1 // pred_check
      _
    $region31: #{tpu_custom_call.1} parent=1 // pred_check_branch
      %97 = sbr.rel (0) target = $region33
    $region32: #{tpu_custom_call.1} parent=1 // pred_region
      %98 = dma.done [#allocation6], 128
    $region33: #{tpu_custom_call.1} parent=1 // pred_fallthru
      _
    // Predicated region
    $region34: #{tpu_custom_call.1} parent=1 // pred_check
      _
    $region35: #{tpu_custom_call.1} parent=1 // pred_check_branch
      %100 = sbr.rel (0) target = $region37
    $region36: #{tpu_custom_call.1} parent=1 // pred_region
      _
    $region37: #{tpu_custom_call.1} parent=1 // pred_fallthru
      _
    %101 = vsyncpa [#allocation5], 1
    %102 = vsyncpa [#allocation6], 1

</llo_original>
